<compile_context>
chip_gen: v5e
topology: v5e:2x2
jax: 0.10.0
libtpu: 0.0.40
codegen_flags: <defaults>
</compile_context>

<pallas_src>
import functools

import jax
import jax.numpy as jnp
import numpy as np
from jax.experimental import pallas as pl
from jax.experimental.pallas import tpu as pltpu

NEG_INF_BIAS = -1e20


def _round_up(n, m):
    return ((n + m - 1) // m) * m


def _choose_tiles(N, q_tile, kv_tile):
    """Return (padded_N, tq, tk).

    For N <= q_tile a single full-extent tile is used (no padding needed).
    Otherwise N is padded up to a multiple of q_tile so the tiled fast path is
    always taken; tk is the largest power-of-two multiple of tq (<= kv_tile)
    that divides the padded N.
    """
    if N <= q_tile:
        return N, N, N
    n_pad = _round_up(N, q_tile)
    tq = q_tile
    tk = tq
    cand = kv_tile
    while cand > tq:
        if n_pad % cand == 0:
            tk = cand
            break
        cand //= 2
    return n_pad, tq, tk


def _default_vmem_limit():
    # ~half of physical VMEM: 64 MiB on v5e/v6e (128 MiB phys), 32 MiB on v7x
    # (64 MiB phys, 2 TCs).  Conservative 32 MiB fallback if the query fails.
    try:
        cap = int(pltpu.get_tpu_info().vmem_capacity_bytes)
        return int(min(cap // 2, 64 * 1024 * 1024))
    except Exception:
        return 32 * 1024 * 1024


# ---------------------------------------------------------------------------
# Kernel 1: row-tiled QKV projection — one (tq, C) @ (C, 3C) bf16 MXU matmul,
# f32 accumulation, lane-dense bf16 q/k/v outputs.  The scale is pre-folded
# into the q columns of Wqkv on the host.
# ---------------------------------------------------------------------------
def _qkv_kernel(x_ref, w_ref, q_ref, k_ref, v_ref, *, C):
    y = jnp.dot(x_ref[0], w_ref[...],
                preferred_element_type=jnp.float32).astype(jnp.bfloat16)
    q_ref[0] = y[:, :C]
    k_ref[0] = y[:, C:2 * C]
    v_ref[0] = y[:, 2 * C:]


# ---------------------------------------------------------------------------
# Kernel 2: flash-style masked attention + fused output projection.
# grid = (B, num_q_tiles, num_kv_tiles); KV axis is the reduction axis.
# ---------------------------------------------------------------------------
def _attn_kernel(q_ref, k_ref, v_ref, bias_ref, wp_ref, bp_ref, o_ref,
                 m_sc, l_sc, acc_sc, *, num_heads, head_dim):
    ki = pl.program_id(2)
    D = head_dim

    @pl.when(ki == 0)
    def _init():
        m_sc[...] = jnp.full_like(m_sc, -jnp.inf)
        l_sc[...] = jnp.zeros_like(l_sc)
        acc_sc[...] = jnp.zeros_like(acc_sc)

    q = q_ref[0]                    # (tq, C) bf16 (already scaled)
    k = k_ref[0]                    # (tk, C) bf16
    v = v_ref[0]                    # (tk, C) bf16
    bias = bias_ref[0]              # (1, tk) f32 additive key mask (0 / -1e20)

    def one_head(h):
        lo = h * D
        qh = q[:, lo:lo + D]                                      # (tq, D)
        kh = k[:, lo:lo + D]                                      # (tk, D)
        vh = v[:, lo:lo + D]                                      # (tk, D)

        # f32 scores; scale already folded into Wq, mask added as bias.
        # TODO(synk): if a bundle dump shows per-head vxpose of kh here, emit
        # K pre-transposed (B, C, N) from the QKV kernel instead.
        s = jax.lax.dot_general(
            qh, kh, (((1,), (1,)), ((), ())),
            preferred_element_type=jnp.float32) + bias            # (tq, tk)

        m_prev = m_sc[:, h:h + 1]                                 # (tq, 1)
        m_new = jnp.maximum(m_prev, jnp.max(s, axis=-1, keepdims=True))
        alpha = jnp.exp(m_prev - m_new)                           # (tq, 1)
        p = jnp.exp(s - m_new)                                    # (tq, tk)
        l_sc[:, h:h + 1] = alpha * l_sc[:, h:h + 1] + jnp.sum(
            p, axis=-1, keepdims=True)
        m_sc[:, h:h + 1] = m_new
        pv = jnp.dot(p.astype(jnp.bfloat16), vh,
                     preferred_element_type=jnp.float32)          # (tq, D)
        return alpha, pv

    # Heads processed in pairs -> one 128-lane-aligned (tq, 2D) accumulator
    # update per pair instead of two masked 64-lane read-modify-writes.
    for h0 in range(0, (num_heads // 2) * 2, 2):
        a0, pv0 = one_head(h0)
        a1, pv1 = one_head(h0 + 1)
        lo = h0 * D
        hi = lo + 2 * D
        al = jnp.concatenate([jnp.broadcast_to(a0, pv0.shape),
                              jnp.broadcast_to(a1, pv1.shape)], axis=-1)
        pv = jnp.concatenate([pv0, pv1], axis=-1)
        acc_sc[:, lo:hi] = al * acc_sc[:, lo:hi] + pv

    if num_heads % 2:
        h = num_heads - 1
        a, pv = one_head(h)
        lo = h * D
        acc_sc[:, lo:lo + D] = a * acc_sc[:, lo:lo + D] + pv

    @pl.when(ki == pl.num_programs(2) - 1)
    def _finalize():
        for h in range(num_heads):
            lo = h * D
            inv_l = pl.reciprocal(l_sc[:, h:h + 1], approx=True)  # EUP
            acc_sc[:, lo:lo + D] = acc_sc[:, lo:lo + D] * inv_l
        attn = acc_sc[...].astype(jnp.bfloat16)                   # (tq, C)
        o_ref[0] = (jnp.dot(attn, wp_ref[...],
                            preferred_element_type=jnp.float32)
                    + bp_ref[...])


def masked_attention_pallas(x, mask, params, num_heads,
                            q_tile=256, kv_tile=1024):
    B, N, C = x.shape
    assert C % num_heads == 0
    D = C // num_heads
    scale = D ** -0.5

    n_pad, tq, tk = _choose_tiles(N, q_tile, kv_tile)
    if n_pad != N:
        x = jnp.pad(x, ((0, 0), (0, n_pad - N), (0, 0)))
        mask = jnp.pad(mask, ((0, 0), (0, n_pad - N)))   # pad value 0 = masked

    # bf16 inputs / weights for the MXU; accumulation stays f32 in-kernel.
    x_bf16 = x.astype(jnp.bfloat16)
    # Fold the 1/sqrt(head_dim) scale into the q columns of Wqkv (exact for
    # power-of-two head dims; otherwise within bf16 tolerance).
    wqkv = params['wqkv'].astype(jnp.float32)
    wqkv = wqkv.at[:, :C].multiply(scale).astype(jnp.bfloat16)
    wproj = params['wproj'].astype(jnp.bfloat16)
    bproj = params['bproj'].reshape(1, C).astype(jnp.float32)

    # Additive key-mask bias (0 keep / -1e20 drop), once per batch element;
    # padded keys are masked out here as well.
    mask_bias = jnp.where(mask == 0, NEG_INF_BIAS, 0.0).astype(
        jnp.float32).reshape(B, 1, n_pad)

    vmem_limit = _default_vmem_limit()

    # ---- QKV projection -----------------------------------------------------
    qkv_kernel = functools.partial(_qkv_kernel, C=C)
    q, k, v = pl.pallas_call(
        qkv_kernel,
        out_shape=(jax.ShapeDtypeStruct((B, n_pad, C), jnp.bfloat16),
                   jax.ShapeDtypeStruct((B, n_pad, C), jnp.bfloat16),
                   jax.ShapeDtypeStruct((B, n_pad, C), jnp.bfloat16)),
        grid=(B, n_pad // tq),
        in_specs=[
            pl.BlockSpec((1, tq, C), lambda b, r: (b, r, 0)),     # x rows (bf16)
            pl.BlockSpec((C, 3 * C), lambda b, r: (0, 0)),        # Wqkv (q cols scaled)
        ],
        out_specs=(
            pl.BlockSpec((1, tq, C), lambda b, r: (b, r, 0)),
            pl.BlockSpec((1, tq, C), lambda b, r: (b, r, 0)),
            pl.BlockSpec((1, tq, C), lambda b, r: (b, r, 0)),
        ),
        compiler_params=pltpu.CompilerParams(
            dimension_semantics=("parallel", "parallel"),
            vmem_limit_bytes=vmem_limit),
    )(x_bf16, wqkv)

    # ---- flash attention + fused output projection --------------------------
    attn_kernel = functools.partial(_attn_kernel, num_heads=num_heads,
                                    head_dim=D)
    out = pl.pallas_call(
        attn_kernel,
        out_shape=jax.ShapeDtypeStruct((B, n_pad, C), jnp.float32),
        grid=(B, n_pad // tq, n_pad // tk),
        in_specs=[
            pl.BlockSpec((1, tq, C), lambda b, qi, ki: (b, qi, 0)),   # q
            pl.BlockSpec((1, tk, C), lambda b, qi, ki: (b, ki, 0)),   # k
            pl.BlockSpec((1, tk, C), lambda b, qi, ki: (b, ki, 0)),   # v
            pl.BlockSpec((1, 1, tk), lambda b, qi, ki: (b, 0, ki)),   # mask bias
            pl.BlockSpec((C, C), lambda b, qi, ki: (0, 0)),           # Wproj
            pl.BlockSpec((1, C), lambda b, qi, ki: (0, 0)),           # bproj
        ],
        out_specs=pl.BlockSpec((1, tq, C), lambda b, qi, ki: (b, qi, 0)),
        scratch_shapes=[
            pltpu.VMEM((tq, num_heads), jnp.float32),   # running max (compact)
            pltpu.VMEM((tq, num_heads), jnp.float32),   # running sum (compact)
            pltpu.VMEM((tq, C), jnp.float32),           # un-normalized acc
        ],
        compiler_params=pltpu.CompilerParams(
            dimension_semantics=("parallel", "parallel", "arbitrary"),
            vmem_limit_bytes=vmem_limit),
    )(q, k, v, mask_bias, wproj, bproj)

    if n_pad != N:
        out = out[:, :N, :]
    return out


# ---------------------------------------------------------------------------
# Pure-JAX reference mirroring the PyTorch MaskedAttention.forward (f32).
# ---------------------------------------------------------------------------
def masked_attention_ref(x, mask, params, num_heads):
    B, N, C = x.shape
    D = C // num_heads
    scale = D ** -0.5
    qkv = (x @ params['wqkv']).reshape(B, N, 3, num_heads, D)
    qkv = qkv.transpose(2, 0, 3, 1, 4)                 # (3, B, H, N, D)
    q, k, v = qkv[0], qkv[1], qkv[2]
    attn = (q * scale) @ jnp.swapaxes(k, -2, -1)       # (B, H, N, N)
    m = mask[:, None, None, :]
    attn = jnp.where(m == 0, NEG_INF_BIAS, attn)
    attn = jax.nn.softmax(attn, axis=-1)
    o = (attn @ v).transpose(0, 2, 1, 3).reshape(B, N, C)
    return o @ params['wproj'] + params['bproj']


def init_params(key, C):
    k1, k2, k3 = jax.random.split(key, 3)
    std = 0.02
    return {
        # weights stored in (in_features, out_features) layout
        'wqkv': std * jax.random.normal(k1, (C, 3 * C), jnp.float32),
        'wproj': std * jax.random.normal(k2, (C, C), jnp.float32),
        'bproj': std * jax.random.normal(k3, (C,), jnp.float32),
    }


if __name__ == "__main__":
    B, N, C = 2, 8, 32
    num_heads = 4

    key = jax.random.PRNGKey(0)
    kx, kp = jax.random.split(key)
    x = jax.random.normal(kx, (B, N, C), jnp.float32)
    # mask: 1 = attend, 0 = masked out.  Mask the last two keys of batch 0.
    mask = jnp.ones((B, N), jnp.int32).at[0, -2:].set(0)
    params = init_params(kp, C)

    out = masked_attention_pallas(x, mask, params, num_heads)
    out = jax.block_until_ready(out)

    ref = masked_attention_ref(x, mask, params, num_heads)
    # bf16 matmuls + folded scale + approx reciprocal => bf16-level tolerance.
    np.testing.assert_allclose(np.asarray(out), np.asarray(ref),
                               rtol=2e-2, atol=3e-3)
    print("KERNEL_OK")
</pallas_src>

<mosaic_0001>
module attributes {stable_mosaic.version = 11 : i64} {
  func.func @_qkv_kernel(%arg0: i32, %arg1: i32, %arg2: memref<1x8x32xbf16, #tpu.memory_space<vmem>>, %arg3: memref<32x96xbf16, #tpu.memory_space<vmem>>, %arg4: memref<1x8x32xbf16, #tpu.memory_space<vmem>>, %arg5: memref<1x8x32xbf16, #tpu.memory_space<vmem>>, %arg6: memref<1x8x32xbf16, #tpu.memory_space<vmem>>) attributes {dimension_semantics = [#tpu.dimension_semantics<parallel>, #tpu.dimension_semantics<parallel>], iteration_bounds = array<i64: 2, 1>, scalar_prefetch = 0 : i64, scratch_operands = 0 : i64, tpu.core_type = #tpu.core_type<tc>, window_params = [{transform_indices = @transform_0, window_bounds = array<i64: 1, 8, 32>}, {pipeline_mode = #tpu.pipeline_mode<synchronous>, transform_indices = @transform_1, window_bounds = array<i64: 32, 96>}, {transform_indices = @transform_2, window_bounds = array<i64: 1, 8, 32>}, {transform_indices = @transform_3, window_bounds = array<i64: 1, 8, 32>}, {transform_indices = @transform_4, window_bounds = array<i64: 1, 8, 32>}]} {
    %c0 = arith.constant 0 : index
    %c0_0 = arith.constant 0 : index
    %c0_1 = arith.constant 0 : index
    %0 = vector.load %arg2[%c0, %c0_0, %c0_1] : memref<1x8x32xbf16, #tpu.memory_space<vmem>>, vector<1x8x32xbf16>
    %1 = vector.shape_cast %0 : vector<1x8x32xbf16> to vector<8x32xbf16>
    %c0_2 = arith.constant 0 : index
    %c0_3 = arith.constant 0 : index
    %2 = vector.load %arg3[%c0_2, %c0_3] : memref<32x96xbf16, #tpu.memory_space<vmem>>, vector<32x96xbf16>
    %cst = arith.constant dense<0.000000e+00> : vector<8x96xf32>
    %3 = tpu.matmul %1, %2, %cst {dimension_numbers = #tpu.dot_dimension_numbers<[1], [0], [0], [1], [0, 0, 1, 1], [], []>} : vector<8x32xbf16>, vector<32x96xbf16>, vector<8x96xf32> -> vector<8x96xf32>
    %4 = arith.truncf %3 : vector<8x96xf32> to vector<8x96xbf16>
    %5 = vector.extract_strided_slice %4 {offsets = [0, 0], sizes = [8, 32], strides = [1, 1]} : vector<8x96xbf16> to vector<8x32xbf16>
    %c0_4 = arith.constant 0 : index
    %c0_5 = arith.constant 0 : index
    %c0_6 = arith.constant 0 : index
    %6 = vector.load %arg4[%c0_4, %c0_5, %c0_6] : memref<1x8x32xbf16, #tpu.memory_space<vmem>>, vector<1x8x32xbf16>
    %7 = vector.shape_cast %6 : vector<1x8x32xbf16> to vector<8x32xbf16>
    %8 = vector.shape_cast %5 : vector<8x32xbf16> to vector<1x8x32xbf16>
    tpu.vector_store %arg4[%c0_4, %c0_5, %c0_6], %8 {strides = array<i32>} : memref<1x8x32xbf16, #tpu.memory_space<vmem>>, vector<1x8x32xbf16>,
    %9 = vector.extract_strided_slice %4 {offsets = [0, 32], sizes = [8, 32], strides = [1, 1]} : vector<8x96xbf16> to vector<8x32xbf16>
    %c0_7 = arith.constant 0 : index
    %c0_8 = arith.constant 0 : index
    %c0_9 = arith.constant 0 : index
    %10 = vector.load %arg5[%c0_7, %c0_8, %c0_9] : memref<1x8x32xbf16, #tpu.memory_space<vmem>>, vector<1x8x32xbf16>
    %11 = vector.shape_cast %10 : vector<1x8x32xbf16> to vector<8x32xbf16>
    %12 = vector.shape_cast %9 : vector<8x32xbf16> to vector<1x8x32xbf16>
    tpu.vector_store %arg5[%c0_7, %c0_8, %c0_9], %12 {strides = array<i32>} : memref<1x8x32xbf16, #tpu.memory_space<vmem>>, vector<1x8x32xbf16>,
    %13 = vector.extract_strided_slice %4 {offsets = [0, 64], sizes = [8, 32], strides = [1, 1]} : vector<8x96xbf16> to vector<8x32xbf16>
    %c0_10 = arith.constant 0 : index
    %c0_11 = arith.constant 0 : index
    %c0_12 = arith.constant 0 : index
    %14 = vector.load %arg6[%c0_10, %c0_11, %c0_12] : memref<1x8x32xbf16, #tpu.memory_space<vmem>>, vector<1x8x32xbf16>
    %15 = vector.shape_cast %14 : vector<1x8x32xbf16> to vector<8x32xbf16>
    %16 = vector.shape_cast %13 : vector<8x32xbf16> to vector<1x8x32xbf16>
    tpu.vector_store %arg6[%c0_10, %c0_11, %c0_12], %16 {strides = array<i32>} : memref<1x8x32xbf16, #tpu.memory_space<vmem>>, vector<1x8x32xbf16>,
    return
  }
  func.func @transform_0(%arg0: i32, %arg1: i32) -> (i32, i32, i32) {
    %c0_i32 = arith.constant 0 : i32
    %c0_i32_0 = arith.constant 0 : i32
    return %arg0, %arg1, %c0_i32 : i32, i32, i32
  }
  func.func @transform_1(%arg0: i32, %arg1: i32) -> (i32, i32) {
    %c0_i32 = arith.constant 0 : i32
    %c0_i32_0 = arith.constant 0 : i32
    %c0_i32_1 = arith.constant 0 : i32
    return %c0_i32, %c0_i32_0 : i32, i32
  }
  func.func @transform_2(%arg0: i32, %arg1: i32) -> (i32, i32, i32) {
    %c0_i32 = arith.constant 0 : i32
    %c0_i32_0 = arith.constant 0 : i32
    return %arg0, %arg1, %c0_i32 : i32, i32, i32
  }
  func.func @transform_3(%arg0: i32, %arg1: i32) -> (i32, i32, i32) {
    %c0_i32 = arith.constant 0 : i32
    %c0_i32_0 = arith.constant 0 : i32
    return %arg0, %arg1, %c0_i32 : i32, i32, i32
  }
  func.func @transform_4(%arg0: i32, %arg1: i32) -> (i32, i32, i32) {
    %c0_i32 = arith.constant 0 : i32
    %c0_i32_0 = arith.constant 0 : i32
    return %arg0, %arg1, %c0_i32 : i32, i32, i32
  }
}

</mosaic_0001>

<llo_original>
// kernel: tpu_custom_call.1
$region0: #{tpu_custom_call.1}
  #allocation0 [shape = 'u32[]', space=smem, size = 0x4, offset = 0x4, fixed_abs, tag = 'smem constant byte address 0x4 - core index']
  #allocation1 [shape = 'u32[72,128]{1,0:T(1,128)}', space=vmem, size = 0x9000, scoped, tag = 'internal scratch']
  %s0 = inlined_call_operand.hbm [shape: bf16[2,8,32], index: 0, kind: input, shape index: {}]
  %s1 = inlined_call_operand.hbm [shape: bf16[32,96], index: 1, kind: input, shape index: {}]
  %s2 = inlined_call_operand.hbm [shape: bf16[2,8,32], index: 2, kind: output, shape index: {0}]
  %s3 = inlined_call_operand.hbm [shape: bf16[2,8,32], index: 3, kind: output, shape index: {1}]
  %s4 = inlined_call_operand.hbm [shape: bf16[2,8,32], index: 4, kind: output, shape index: {2}]
  %5 = xla_tuple %s2, %s3, %s4
  %s6 = sld [smem:[#allocation0]]
  $region65: #{tpu_custom_call.1} parent=0
    _
  %s8 = ssub.s32 1, %s6
  %s9 = scalar_select 0, %s8, %s6
  $region1: #{tpu_custom_call.1} parent=0
    #allocation2 [shape = 'u8[4096]{0}', space=vmem, size = 0x1000, scoped, tag = 'input window, operand 0']
    #allocation3 [shape = 's32[2]{0}', space=sflag, size = 0x8, scoped, tag = 'scoped memory for tpu_custom_call.1']
    #allocation4 [shape = 's32[2]{0}', space=sflag, size = 0x8, scoped, tag = 'scoped memory for tpu_custom_call.1']
    #allocation5 [shape = 'u8[8192]{0}', space=vmem, size = 0x2000, scoped, tag = 'input window, operand 1, single buffered']
    #allocation6 [shape = 's32[1]{0}', space=sflag, size = 0x4, scoped, tag = 'scoped memory for tpu_custom_call.1']
    #allocation7 [shape = 'u8[4096]{0}', space=vmem, size = 0x1000, scoped, tag = 'output window, operand 0']
    #allocation8 [shape = 'u8[4096]{0}', space=vmem, size = 0x1000, scoped, tag = 'output window, operand 1']
    #allocation9 [shape = 's32[2]{0}', space=sflag, size = 0x8, scoped, tag = 'scoped memory for tpu_custom_call.1']
    #allocation10 [shape = 'u8[4096]{0}', space=vmem, size = 0x1000, scoped, tag = 'output window, operand 2']
    %10 = vsyncpa [#allocation3], 0
    %s11 = scalar_lea.sflag [#allocation3], 1
    %12 = vsyncpa %s11, 0
    %13 = vsyncpa [#allocation6], 0
    %14 = vsyncpa [#allocation4], 0
    %s15 = scalar_lea.sflag [#allocation4], 1
    %16 = vsyncpa %s15, 0
    %17 = vsyncpa [#allocation9], 0
    %s18 = scalar_lea.sflag [#allocation9], 1
    %19 = vsyncpa %s18, 0
    loop: start=0, step=1, limit=4
    $region2: #{tpu_custom_call.1} parent=1 // loop_pre_header
      _
    $region3: #{tpu_custom_call.1} parent=1 // loop_header
      %s21 = sphi 0, %s25
      %p22 = scmp.ge.s32.totalorder %s21, 4
      %s28 = sphi 0, %s40
      %s29 = sphi 0, %s36
      %s30 = sphi 0, %s28
      %s31 = sphi 0, %s29
      %s32 = sphi 0, %s30
      %s33 = sphi 0, %s31
      %s45 = sphi 0, %s47
      %s48 = sphi 0, %s45
      %s49 = sphi 0, %s48
      %s65 = sphi 0, %s49
      %s69 = sphi 0, %s69
      %s71 = sphi 0, %s69
      %s72 = sphi 0, %s71
      %s86 = sphi 0, %s72
      %s94 = sphi 0, %s96
      %s97 = sphi 0, %s94
      %s98 = sphi 0, %s97
      %s114 = sphi 0, %s98
      %s122 = sphi 0, %s124
      %s125 = sphi 0, %s122
      %s126 = sphi 0, %s125
      %s142 = sphi 0, %s126
      %s150 = sphi 0, %s152
      %s153 = sphi 0, %s150
      %s154 = sphi 0, %s153
      %s170 = sphi 0, %s154
    $region4: #{tpu_custom_call.1} parent=1 // loop_header_branch
      %24 = sbr.rel (%p22) target = $region8
    $region5: #{tpu_custom_call.1} parent=1 // loop_body
      %s26 = ssub.s32 %s21, 1
      %s27 = ssub.s32 %s21, 2
      %s34 = sadd.s32 1, %s29
      %p35 = scmp.ge.s32.totalorder %s34, 1
      %s36 = scalar_select %p35, 0, %s34
      %s37 = sadd.s32 1, %s28
      %s38 = scalar_select %p35, %s37, %s28
      %p39 = scmp.ge.s32.totalorder %s38, 2
      %s40 = scalar_select %p39, 0, %s38
      %s41 = ssub.s32 %s28, %s40
      %s42 = ssub.s32 %s29, %s36
      %s43 = sor.u32 %s41, %s42
      %p44 = scmp.eq.s32.totalorder %s43, 0
      %s46 = sadd.s32 %s45, 1
      %s47 = scalar_select %p44, %s45, %s46
      %p50 = pneg %p44
      %p51 = scmp.eq.s32.totalorder %s21, 1
      %p52 = por %p50, %p51
      %p53 = scmp.ne.s32.totalorder %s45, %s48
      %p54 = scmp.eq.s32.totalorder %s21, 0
      %p55 = por %p53, %p54
      %p56 = scmp.ne.s32.totalorder %s45, %s48
      %p57 = scmp.eq.s32.totalorder %s26, 1
      %p58 = por %p56, %p57
      %p59 = scmp.ne.s32.totalorder %s48, %s49
      %p60 = scmp.eq.s32.totalorder %s26, 0
      %p61 = por %p59, %p60
      %p62 = scmp.ne.s32.totalorder %s48, %s49
      %p63 = scmp.eq.s32.totalorder %s27, 1
      %p64 = por %p62, %p63
      %p66 = scmp.ne.s32.totalorder %s49, %s65
      %p67 = scmp.eq.s32.totalorder %s27, 0
      %p68 = por %p66, %p67
      %s70 = sadd.s32 %s69, 1
      %p73 = scmp.eq.s32.totalorder %s21, 1
      %p74 = scmp.ne.s32.totalorder %s69, %s71
      %p75 = scmp.eq.s32.totalorder %s21, 0
      %p76 = por %p74, %p75
      %p77 = scmp.ne.s32.totalorder %s69, %s71
      %p78 = scmp.eq.s32.totalorder %s26, 1
      %p79 = por %p77, %p78
      %p80 = scmp.ne.s32.totalorder %s71, %s72
      %p81 = scmp.eq.s32.totalorder %s26, 0
      %p82 = por %p80, %p81
      %p83 = scmp.ne.s32.totalorder %s71, %s72
      %p84 = scmp.eq.s32.totalorder %s27, 1
      %p85 = por %p83, %p84
      %p87 = scmp.ne.s32.totalorder %s72, %s86
      %p88 = scmp.eq.s32.totalorder %s27, 0
      %p89 = por %p87, %p88
      %s90 = ssub.s32 %s28, %s40
      %s91 = ssub.s32 %s29, %s36
      %s92 = sor.u32 %s90, %s91
      %p93 = scmp.eq.s32.totalorder %s92, 0
      %s95 = sadd.s32 %s94, 1
      %s96 = scalar_select %p93, %s94, %s95
      %p99 = pneg %p93
      %p100 = scmp.eq.s32.totalorder %s21, 1
      %p101 = por %p99, %p100
      %p102 = scmp.ne.s32.totalorder %s94, %s97
      %p103 = scmp.eq.s32.totalorder %s21, 0
      %p104 = por %p102, %p103
      %p105 = scmp.ne.s32.totalorder %s94, %s97
      %p106 = scmp.eq.s32.totalorder %s26, 1
      %p107 = por %p105, %p106
      %p108 = scmp.ne.s32.totalorder %s97, %s98
      %p109 = scmp.eq.s32.totalorder %s26, 0
      %p110 = por %p108, %p109
      %p111 = scmp.ne.s32.totalorder %s97, %s98
      %p112 = scmp.eq.s32.totalorder %s27, 1
      %p113 = por %p111, %p112
      %p115 = scmp.ne.s32.totalorder %s98, %s114
      %p116 = scmp.eq.s32.totalorder %s27, 0
      %p117 = por %p115, %p116
      %s118 = ssub.s32 %s28, %s40
      %s119 = ssub.s32 %s29, %s36
      %s120 = sor.u32 %s118, %s119
      %p121 = scmp.eq.s32.totalorder %s120, 0
      %s123 = sadd.s32 %s122, 1
      %s124 = scalar_select %p121, %s122, %s123
      %p127 = pneg %p121
      %p128 = scmp.eq.s32.totalorder %s21, 1
      %p129 = por %p127, %p128
      %p130 = scmp.ne.s32.totalorder %s122, %s125
      %p131 = scmp.eq.s32.totalorder %s21, 0
      %p132 = por %p130, %p131
      %p133 = scmp.ne.s32.totalorder %s122, %s125
      %p134 = scmp.eq.s32.totalorder %s26, 1
      %p135 = por %p133, %p134
      %p136 = scmp.ne.s32.totalorder %s125, %s126
      %p137 = scmp.eq.s32.totalorder %s26, 0
      %p138 = por %p136, %p137
      %p139 = scmp.ne.s32.totalorder %s125, %s126
      %p140 = scmp.eq.s32.totalorder %s27, 1
      %p141 = por %p139, %p140
      %p143 = scmp.ne.s32.totalorder %s126, %s142
      %p144 = scmp.eq.s32.totalorder %s27, 0
      %p145 = por %p143, %p144
      %s146 = ssub.s32 %s28, %s40
      %s147 = ssub.s32 %s29, %s36
      %s148 = sor.u32 %s146, %s147
      %p149 = scmp.eq.s32.totalorder %s148, 0
      %s151 = sadd.s32 %s150, 1
      %s152 = scalar_select %p149, %s150, %s151
      %p155 = pneg %p149
      %p156 = scmp.eq.s32.totalorder %s21, 1
      %p157 = por %p155, %p156
      %p158 = scmp.ne.s32.totalorder %s150, %s153
      %p159 = scmp.eq.s32.totalorder %s21, 0
      %p160 = por %p158, %p159
      %p161 = scmp.ne.s32.totalorder %s150, %s153
      %p162 = scmp.eq.s32.totalorder %s26, 1
      %p163 = por %p161, %p162
      %p164 = scmp.ne.s32.totalorder %s153, %s154
      %p165 = scmp.eq.s32.totalorder %s26, 0
      %p166 = por %p164, %p165
      %p167 = scmp.ne.s32.totalorder %s153, %s154
      %p168 = scmp.eq.s32.totalorder %s27, 1
      %p169 = por %p167, %p168
      %p171 = scmp.ne.s32.totalorder %s154, %s170
      %p172 = scmp.eq.s32.totalorder %s27, 0
      %p173 = por %p171, %p172
      %p174 = scmp.le.s32.totalorder 1, %s21
      %p175 = scmp.lt.s32.totalorder %s21, 3
      %p176 = pnand %p174, %p175
      %p177 = pneg %p176
      // Predicated region
      $region9: #{tpu_custom_call.1} parent=5 // pred_check
        _
      $region10: #{tpu_custom_call.1} parent=5 // pred_check_branch
        %179 = sbr.rel (%p176) target = $region12
      $region11: #{tpu_custom_call.1} parent=5 // pred_region
        %s180 = ssub.s32 %s21, 1
        // Predicated region
        $region13: #{tpu_custom_call.1} parent=11 // pred_check
          %p181 = pneg %p82
        $region14: #{tpu_custom_call.1} parent=11 // pred_check_branch
          %183 = sbr.rel (%p181) target = $region16
        $region15: #{tpu_custom_call.1} parent=11 // pred_region
          %185 = vsyncadd [#allocation6], 0
          %s186 = sshll.u32 %s1, 4
          %s187 = int_to_ptr.hbm [resolvable:$true] %s186
          %s188 = sshll.u32 [#allocation5], 4
          %s189 = int_to_ptr.vmem [resolvable:$true] %s188
          %194 = dma.hbm_to_vmem [thread:$0]  %s187, 256, %s189, [#allocation6], 64, 64, 4
        $region16: #{tpu_custom_call.1} parent=11 // pred_fallthru
          _
      $region12: #{tpu_custom_call.1} parent=5 // pred_fallthru
        _
      %p195 = scmp.lt.s32.totalorder %s21, 2
      // Predicated region
      $region17: #{tpu_custom_call.1} parent=5 // pred_check
        %p196 = pneg %p195
      $region18: #{tpu_custom_call.1} parent=5 // pred_check_branch
        %198 = sbr.rel (%p196) target = $region20
      $region19: #{tpu_custom_call.1} parent=5 // pred_region
        // Predicated region
        $region21: #{tpu_custom_call.1} parent=19 // pred_check
          %p199 = pneg %p55
        $region22: #{tpu_custom_call.1} parent=19 // pred_check_branch
          %201 = sbr.rel (%p199) target = $region24
        $region23: #{tpu_custom_call.1} parent=19 // pred_region
          %s202 = sand.u32 %s45, 1
          %s203 = scalar_lea.sflag [#allocation3], %s202
          %s204 = sand.u32 %s45, 1
          %s205 = smul.addr %s204, 4
          %s206 = scalar_lea.vmem [#allocation2], %s205
          %208 = vsyncadd %s203, 0
          %s209 = sadd.s32 %s29, %s28
          %s210 = smul.addr %s209, 4
          %s211 = scalar_lea.hbm %s0, %s210
          %s213 = sshll.u32 %s211, 4
          %s214 = int_to_ptr.hbm [resolvable:$true] %s213
          %s215 = sshll.u32 %s206, 4
          %s216 = int_to_ptr.vmem [resolvable:$true] %s215
          %218 = dma.hbm_to_vmem [thread:$0]  %s214, 64, %s216, %s203
        $region24: #{tpu_custom_call.1} parent=19 // pred_fallthru
          _
      $region20: #{tpu_custom_call.1} parent=5 // pred_fallthru
        _
      %p219 = scmp.le.s32.totalorder 1, %s21
      %p220 = scmp.lt.s32.totalorder %s21, 3
      %p221 = pnand %p219, %p220
      %p222 = pneg %p221
      // Predicated region
      $region25: #{tpu_custom_call.1} parent=5 // pred_check
        _
      $region26: #{tpu_custom_call.1} parent=5 // pred_check_branch
        %224 = sbr.rel (%p221) target = $region28
      $region27: #{tpu_custom_call.1} parent=5 // pred_region
        %s225 = ssub.s32 %s21, 1
        %s226 = sand.u32 %s48, 1
        %s227 = scalar_lea.sflag [#allocation3], %s226
        %s228 = sand.u32 %s48, 1
        %s229 = smul.addr %s228, 4
        %s230 = scalar_lea.vmem [#allocation2], %s229
        // Predicated region
        $region29: #{tpu_custom_call.1} parent=27 // pred_check
          %p231 = pneg %p61
        $region30: #{tpu_custom_call.1} parent=27 // pred_check_branch
          %233 = sbr.rel (%p231) target = $region32
        $region31: #{tpu_custom_call.1} parent=27 // pred_region
          %235 = dma.done %s227, 64
        $region32: #{tpu_custom_call.1} parent=27 // pred_fallthru
          _
        // Predicated region
        $region33: #{tpu_custom_call.1} parent=27 // pred_check
          %p236 = pneg %p82
        $region34: #{tpu_custom_call.1} parent=27 // pred_check_branch
          %238 = sbr.rel (%p236) target = $region36
        $region35: #{tpu_custom_call.1} parent=27 // pred_region
          %240 = dma.done [#allocation6], 256
        $region36: #{tpu_custom_call.1} parent=27 // pred_fallthru
          _
        %s241 = sand.u32 %s48, 1
        %s242 = scalar_lea.sflag [#allocation3], %s241
        %s243 = sand.u32 %s48, 1
        %s244 = smul.addr %s243, 4
        %s245 = scalar_lea.vmem [#allocation2], %s244
        %p246 = pneg %p61
        %p247 = pneg %p58
        %p248 = pneg %p82
        %p249 = pneg %p79
        %p250 = pneg %p110
        %p251 = pneg %p107
        %s252 = sand.u32 %s97, 1
        %s253 = scalar_lea.sflag [#allocation4], %s252
        %s254 = sand.u32 %s97, 1
        %s255 = smul.addr %s254, 4
        %s256 = scalar_lea.vmem [#allocation7], %s255
        %p257 = pneg %p138
        %p258 = pneg %p135
        %s259 = sand.u32 %s26, 1
        %s260 = scalar_lea.sflag [#allocation9], %s259
        %s261 = sand.u32 %s125, 1
        %s262 = smul.addr %s261, 4
        %s263 = scalar_lea.vmem [#allocation8], %s262
        %p264 = pneg %p166
        %p265 = pneg %p163
        %s266 = sand.u32 %s26, 1
        %s267 = scalar_lea.sflag [#allocation9], %s266
        %s268 = sand.u32 %s153, 1
        %s269 = smul.addr %s268, 4
        %s270 = scalar_lea.vmem [#allocation10], %s269
        %v272 = vld [vmem:[%s230] sm:$0xf]
        %v273 = vld [vmem:[#allocation5] sm:$0xf]
        %v274 = vld [vmem:[#allocation5 + $0x4] sm:$0xf]
        %v275 = vld [vmem:[#allocation5 + $0x8] sm:$0xf]
        %v276 = vld [vmem:[#allocation5 + $0xc] sm:$0xf]
        %v281 = vunpack.c.l.b16 %v273
        %v282 = vunpack.c.l.b16 %v274
        %v283 = vunpack.c.l.b16 %v275
        %v284 = vunpack.c.l.b16 %v276
        %v285 = vpack.c.b16 %v282, %v281
        %v286 = vpack.c.b16 %v284, %v283
        %vm289 = vcmask 261120
        %v291 = vsel %vm289, %v272, 0
        %293 = vmatpush.bf16.msra.mxu0 0
        %294 = vmatpush.bf16.msra.mxu0 0
        %295 = vmatpush.bf16.msra.mxu0 0
        %296 = vmatpush.bf16.msra.mxu0 0
        %297 = vmatpush.bf16.msra.mxu0 0
        %298 = vmatpush.bf16.msra.mxu0 0
        %299 = vmatpush.bf16.msra.mxu0 %v286
        %300 = vmatpush.bf16.msra.mxu0 %v285
        %301 = vmatmul.bf16.gmra.mxu0 %v291
        %v302 = vpop.f32.mrf.mxu0
        %v303 = vadd.f32 0.0, %v302
        %v304 = vpop.f32.mrf.mxu0
        %305 = vdwg.mxu0
        %v306 = vpack.c.bf16 %v303, %v303
        %vm307 = vcmask 257024
        %308 = vst.msk [vmem:[%s256] sm:$0xf] %vm307, %v306
        %310 = vrot.lane.b32.xlu0 %v306, 96
        %v311 = vpop.permute.xlu0 %310
        %313 = vst.msk [vmem:[%s263] sm:$0xf] %vm307, %v311
        %314 = vrot.lane.b32.xlu0 %v306, 64
        %v315 = vpop.permute.xlu0 %314
        %317 = vst.msk [vmem:[%s270] sm:$0xf] %vm307, %v315
        %s318 = sand.u32 %s97, 1
        %s319 = scalar_lea.sflag [#allocation4], %s318
        %s320 = sand.u32 %s97, 1
        %s321 = smul.addr %s320, 4
        %s322 = scalar_lea.vmem [#allocation7], %s321
        %s323 = sand.u32 %s26, 1
        %s324 = scalar_lea.sflag [#allocation9], %s323
        %s325 = sand.u32 %s125, 1
        %s326 = smul.addr %s325, 4
        %s327 = scalar_lea.vmem [#allocation8], %s326
        %s328 = sand.u32 %s26, 1
        %s329 = scalar_lea.sflag [#allocation9], %s328
        %s330 = sand.u32 %s153, 1
        %s331 = smul.addr %s330, 4
        %s332 = scalar_lea.vmem [#allocation10], %s331
        // Predicated region
        $region37: #{tpu_custom_call.1} parent=27 // pred_check
          %p333 = pneg %p107
        $region38: #{tpu_custom_call.1} parent=27 // pred_check_branch
          %335 = sbr.rel (%p333) target = $region40
        $region39: #{tpu_custom_call.1} parent=27 // pred_region
          %337 = vsyncadd %s319, 0
          %s338 = sadd.s32 %s31, %s30
          %s339 = smul.addr %s338, 4
          %s340 = scalar_lea.hbm %s2, %s339
          %s342 = sshll.u32 %s322, 4
          %s343 = int_to_ptr.vmem [resolvable:$true] %s342
          %s344 = sshll.u32 %s340, 4
          %s345 = int_to_ptr.hbm [resolvable:$true] %s344
          %347 = dma.vmem_to_hbm [thread:$0]  %s343, 64, %s345, %s319
        $region40: #{tpu_custom_call.1} parent=27 // pred_fallthru
          _
        // Predicated region
        $region41: #{tpu_custom_call.1} parent=27 // pred_check
          %p348 = pneg %p135
        $region42: #{tpu_custom_call.1} parent=27 // pred_check_branch
          %350 = sbr.rel (%p348) target = $region44
        $region43: #{tpu_custom_call.1} parent=27 // pred_region
          %352 = vsyncadd %s324, 0
          %s353 = sadd.s32 %s31, %s30
          %s354 = smul.addr %s353, 4
          %s355 = scalar_lea.hbm %s3, %s354
          %s357 = sshll.u32 %s327, 4
          %s358 = int_to_ptr.vmem [resolvable:$true] %s357
          %s359 = sshll.u32 %s355, 4
          %s360 = int_to_ptr.hbm [resolvable:$true] %s359
          %362 = dma.vmem_to_hbm [thread:$0]  %s358, 64, %s360, %s324
        $region44: #{tpu_custom_call.1} parent=27 // pred_fallthru
          _
        // Predicated region
        $region45: #{tpu_custom_call.1} parent=27 // pred_check
          %p363 = pneg %p163
        $region46: #{tpu_custom_call.1} parent=27 // pred_check_branch
          %365 = sbr.rel (%p363) target = $region48
        $region47: #{tpu_custom_call.1} parent=27 // pred_region
          %367 = vsyncadd %s329, 0
          %s368 = sadd.s32 %s31, %s30
          %s369 = smul.addr %s368, 4
          %s370 = scalar_lea.hbm %s4, %s369
          %s372 = sshll.u32 %s332, 4
          %s373 = int_to_ptr.vmem [resolvable:$true] %s372
          %s374 = sshll.u32 %s370, 4
          %s375 = int_to_ptr.hbm [resolvable:$true] %s374
          %377 = dma.vmem_to_hbm [thread:$0]  %s373, 64, %s375, %s329
        $region48: #{tpu_custom_call.1} parent=27 // pred_fallthru
          _
      $region28: #{tpu_custom_call.1} parent=5 // pred_fallthru
        _
      %p378 = scmp.le.s32.totalorder 2, %s21
      // Predicated region
      $region49: #{tpu_custom_call.1} parent=5 // pred_check
        %p379 = pneg %p378
      $region50: #{tpu_custom_call.1} parent=5 // pred_check_branch
        %381 = sbr.rel (%p379) target = $region52
      $region51: #{tpu_custom_call.1} parent=5 // pred_region
        %s382 = ssub.s32 %s21, 2
        // Predicated region
        $region53: #{tpu_custom_call.1} parent=51 // pred_check
          %p383 = pneg %p113
        $region54: #{tpu_custom_call.1} parent=51 // pred_check_branch
          %385 = sbr.rel (%p383) target = $region56
        $region55: #{tpu_custom_call.1} parent=51 // pred_region
          %s386 = sand.u32 %s98, 1
          %s387 = scalar_lea.sflag [#allocation4], %s386
          %s388 = sand.u32 %s98, 1
          %s389 = smul.addr %s388, 4
          %s390 = scalar_lea.vmem [#allocation7], %s389
          %392 = dma.done %s387, 64
        $region56: #{tpu_custom_call.1} parent=51 // pred_fallthru
          _
        // Predicated region
        $region57: #{tpu_custom_call.1} parent=51 // pred_check
          %p393 = pneg %p141
        $region58: #{tpu_custom_call.1} parent=51 // pred_check_branch
          %395 = sbr.rel (%p393) target = $region60
        $region59: #{tpu_custom_call.1} parent=51 // pred_region
          %s396 = sand.u32 %s27, 1
          %s397 = scalar_lea.sflag [#allocation9], %s396
          %s398 = sand.u32 %s126, 1
          %s399 = smul.addr %s398, 4
          %s400 = scalar_lea.vmem [#allocation8], %s399
          %402 = dma.done %s397, 64
        $region60: #{tpu_custom_call.1} parent=51 // pred_fallthru
          _
        // Predicated region
        $region61: #{tpu_custom_call.1} parent=51 // pred_check
          %p403 = pneg %p169
        $region62: #{tpu_custom_call.1} parent=51 // pred_check_branch
          %405 = sbr.rel (%p403) target = $region64
        $region63: #{tpu_custom_call.1} parent=51 // pred_region
          %s406 = sand.u32 %s27, 1
          %s407 = scalar_lea.sflag [#allocation9], %s406
          %s408 = sand.u32 %s154, 1
          %s409 = smul.addr %s408, 4
          %s410 = scalar_lea.vmem [#allocation10], %s409
          %412 = dma.done %s407, 64
        $region64: #{tpu_custom_call.1} parent=51 // pred_fallthru
          _
      $region52: #{tpu_custom_call.1} parent=5 // pred_fallthru
        _
    $region6: #{tpu_custom_call.1} parent=1 // loop_footer
      %s25 = sadd.s32 1, %s21
    $region7: #{tpu_custom_call.1} parent=1 // loop_footer_branch
      %20 = sbr.rel target = $region3
    $region8: #{tpu_custom_call.1} parent=1 // loop_exit
      _
    %413 = vsyncpa [#allocation3], 1
    %s414 = scalar_lea.sflag [#allocation3], 1
    %415 = vsyncpa %s414, 1
    %416 = vsyncpa [#allocation6], 1
    %417 = vsyncpa [#allocation4], 1
    %s418 = scalar_lea.sflag [#allocation4], 1
    %419 = vsyncpa %s418, 1
    %420 = vsyncpa [#allocation9], 1
    %s421 = scalar_lea.sflag [#allocation9], 1
    %422 = vsyncpa %s421, 1

</llo_original>
